<compile_context>
chip_gen: v5e
topology: v5e:2x2
jax: 0.10.0
libtpu: 0.0.40
codegen_flags: <defaults>
</compile_context>

<pallas_src>
import functools

import jax
import jax.numpy as jnp
from jax.experimental import pallas as pl
from jax.experimental.pallas import tpu as pltpu


# ---------------------------------------------------------------------------
# Row-tile selection: byte-budgeted (~2 MiB per block), dtype-aware sublane
# multiple, ragged grid handled by pl.cdiv at the call sites.
# ---------------------------------------------------------------------------
def _pick_row_tile(n_rows: int, d: int, itemsize: int,
                   target_bytes: int = 2 * 1024 * 1024,
                   max_tile: int = 4096) -> int:
    if itemsize >= 4:
        mult = 8
    elif itemsize == 2:
        mult = 16
    else:
        mult = 32

    if n_rows <= mult:
        return n_rows                      # block == full dim is always legal

    bytes_per_row = max(d * itemsize, 1)
    rows_budget = max(mult, target_bytes // bytes_per_row)
    t = min(max_tile, rows_budget, n_rows)
    t = max(mult, (t // mult) * mult)

    # Prefer >= 4 grid steps when the array is big enough (pipelining +
    # megacore sharding on v7x), without dropping below a sensible block.
    while t > 8 * mult and (n_rows + t - 1) // t < 4:
        t = max(mult, ((t // 2) // mult) * mult)
    return t


# ---------------------------------------------------------------------------
# Kernel 1: LayerNormalization (torch semantics: unbiased std, scalar alpha/bias)
# ---------------------------------------------------------------------------
def _layer_norm_kernel(x_ref, alpha_ref, bias_ref, o_ref, *, eps, inv_d, inv_nm1):
    x = x_ref[...].astype(jnp.float32)                       # (T, D)
    s1 = jnp.sum(x, axis=-1, keepdims=True)                  # independent XLU
    s2 = jnp.sum(x * x, axis=-1, keepdims=True)              # reductions
    mean = s1 * inv_d
    var = jnp.maximum((s2 - mean * s1) * inv_nm1, 0.0)       # unbiased (N-1)
    std = jnp.sqrt(var)
    # Per-row exact reciprocal; fold scalar alpha in per-row -> one (T,D) FMA.
    scale = alpha_ref[0] * (1.0 / (std + eps))               # (T, 1)
    o_ref[...] = ((x - mean) * scale + bias_ref[0]).astype(o_ref.dtype)


def layer_norm(x, alpha, bias, *, eps=1e-6):
    orig_shape = x.shape
    d = orig_shape[-1]
    n = 1
    for s in orig_shape[:-1]:
        n *= s
    x2 = x.reshape(n, d)
    t = _pick_row_tile(n, d, jnp.dtype(x.dtype).itemsize)

    kernel = functools.partial(
        _layer_norm_kernel,
        eps=float(eps),
        inv_d=1.0 / float(d),
        inv_nm1=1.0 / float(max(d - 1, 1)),
    )

    out = pl.pallas_call(
        kernel,
        out_shape=jax.ShapeDtypeStruct((n, d), x.dtype),
        grid_spec=pltpu.PrefetchScalarGridSpec(
            num_scalar_prefetch=0,
            grid=(pl.cdiv(n, t),),
            in_specs=[
                pl.BlockSpec((t, d), lambda i: (i, 0)),
                pl.BlockSpec(memory_space=pltpu.MemorySpace.SMEM),  # alpha (1,)
                pl.BlockSpec(memory_space=pltpu.MemorySpace.SMEM),  # bias  (1,)
            ],
            out_specs=pl.BlockSpec((t, d), lambda i: (i, 0)),
        ),
        compiler_params=pltpu.CompilerParams(
            dimension_semantics=("parallel",),
            vmem_limit_bytes=32 * 1024 * 1024,
        ),
    )(x2, alpha.astype(jnp.float32), bias.astype(jnp.float32))
    return out.reshape(orig_shape)


# ---------------------------------------------------------------------------
# Kernel 2: fused dropout + residual add:  out = x + dropout(y)
# ---------------------------------------------------------------------------
def _residual_add_kernel(x_ref, y_ref, o_ref):
    o_ref[...] = x_ref[...] + y_ref[...]


def _residual_dropout_add_kernel(x_ref, y_ref, u_ref, o_ref, *, p, keep_scale):
    x = x_ref[...].astype(jnp.float32)
    y = y_ref[...].astype(jnp.float32)
    keep = u_ref[...] >= p                                  # P(keep) = 1 - p
    y = jnp.where(keep, y * keep_scale, 0.0)
    o_ref[...] = (x + y).astype(o_ref.dtype)


def residual_dropout_add(x, y, *, p=0.0, training=False, seed=0):
    orig_shape = x.shape
    d = orig_shape[-1]
    n = 1
    for s in orig_shape[:-1]:
        n *= s

    use_dropout = bool(training) and float(p) > 0.0
    if use_dropout and float(p) >= 1.0:
        return x                                             # everything dropped

    x2 = x.reshape(n, d)
    y2 = y.reshape(n, d)
    t = _pick_row_tile(n, d, jnp.dtype(x.dtype).itemsize)

    row_spec = pl.BlockSpec((t, d), lambda i: (i, 0))
    params = pltpu.CompilerParams(
        dimension_semantics=("parallel",),
        vmem_limit_bytes=32 * 1024 * 1024,
    )

    if not use_dropout:
        out = pl.pallas_call(
            _residual_add_kernel,
            out_shape=jax.ShapeDtypeStruct((n, d), x.dtype),
            grid_spec=pltpu.PrefetchScalarGridSpec(
                num_scalar_prefetch=0,
                grid=(pl.cdiv(n, t),),
                in_specs=[row_spec, row_spec],
                out_specs=row_spec,
            ),
            compiler_params=params,
        )(x2, y2)
        return out.reshape(orig_shape)

    # Portable dropout: uniforms generated once here (deterministic in `seed`)
    # and streamed through the fused kernel.
    u = jax.random.uniform(jax.random.PRNGKey(seed), orig_shape,
                           dtype=jnp.float32).reshape(n, d)
    kernel = functools.partial(
        _residual_dropout_add_kernel,
        p=float(p),
        keep_scale=1.0 / (1.0 - float(p)),
    )
    out = pl.pallas_call(
        kernel,
        out_shape=jax.ShapeDtypeStruct((n, d), x.dtype),
        grid_spec=pltpu.PrefetchScalarGridSpec(
            num_scalar_prefetch=0,
            grid=(pl.cdiv(n, t),),
            in_specs=[row_spec, row_spec, row_spec],
            out_specs=row_spec,
        ),
        compiler_params=params,
    )(x2, y2, u)
    return out.reshape(orig_shape)


# ---------------------------------------------------------------------------
# ResidualConnection.forward(x, sublayer) = x + dropout(sublayer(norm(x)))
# ---------------------------------------------------------------------------
def residual_connection(x, sublayer, alpha, bias, *, dropout_p=0.0,
                        training=False, eps=1e-6, seed=0):
    normed = layer_norm(x, alpha, bias, eps=eps)
    # `sublayer` is an arbitrary callable (attention / FFN); applied as plain JAX.
    y = sublayer(normed)
    return residual_dropout_add(x, y, p=dropout_p, training=training, seed=seed)


if __name__ == "__main__":
    B, S, D = 2, 8, 128
    eps = 1e-6
    seed = 42
    p_drop = 0.1

    key = jax.random.PRNGKey(0)
    kx, kw = jax.random.split(key)
    x = jax.random.normal(kx, (B, S, D), dtype=jnp.float32)
    w = jax.random.normal(kw, (D, D), dtype=jnp.float32) * 0.02

    # LayerNormalization parameters (scalar alpha=1, bias=0, as in __init__).
    alpha = jnp.ones((1,), dtype=jnp.float32)
    bias = jnp.zeros((1,), dtype=jnp.float32)

    # Stand-in sublayer (e.g. a projection); applied outside the kernels.
    sublayer = lambda t: jnp.dot(t, w)

    # Reference LayerNorm (torch.std default: unbiased, ddof=1).
    mean = jnp.mean(x, axis=-1, keepdims=True)
    std = jnp.std(x, axis=-1, keepdims=True, ddof=1)
    ref_norm = alpha * (x - mean) / (std + eps) + bias
    ref_y = jnp.dot(ref_norm, w)

    # --- eval-mode forward (dropout is identity, exact reference check) ---
    out = residual_connection(x, sublayer, alpha, bias,
                              dropout_p=p_drop, training=False, eps=eps)
    out = jax.block_until_ready(out)
    ref = x + ref_y
    assert out.shape == (B, S, D)
    assert out.dtype == jnp.float32
    assert jnp.allclose(out, ref, atol=1e-4, rtol=1e-4)

    # --- training-mode check (deterministic dropout from `seed`) ---
    out_tr = residual_connection(x, sublayer, alpha, bias,
                                 dropout_p=p_drop, training=True, eps=eps,
                                 seed=seed)
    out_tr = jax.block_until_ready(out_tr)
    u = jax.random.uniform(jax.random.PRNGKey(seed), x.shape, dtype=jnp.float32)
    ref_tr = x + jnp.where(u >= p_drop, ref_y / (1.0 - p_drop), 0.0)
    assert out_tr.shape == (B, S, D)
    assert bool(jnp.all(jnp.isfinite(out_tr)))
    assert jnp.allclose(out_tr, ref_tr, atol=1e-4, rtol=1e-4)

    print("KERNEL_OK")
</pallas_src>

<mosaic_0001>
module attributes {stable_mosaic.version = 11 : i64} {
  func.func @_layer_norm_kernel(%arg0: i32, %arg1: memref<16x128xf32, #tpu.memory_space<vmem>>, %arg2: memref<1xf32, #tpu.memory_space<smem>>, %arg3: memref<1xf32, #tpu.memory_space<smem>>, %arg4: memref<16x128xf32, #tpu.memory_space<vmem>>) attributes {dimension_semantics = [#tpu.dimension_semantics<parallel>], iteration_bounds = array<i64: 1>, scalar_prefetch = 0 : i64, scratch_operands = 0 : i64, tpu.core_type = #tpu.core_type<tc>, window_params = [{transform_indices = @transform_0, window_bounds = array<i64: 16, 128>}, {transform_indices = @transform_1, window_bounds = array<i64: 1>}, {transform_indices = @transform_2, window_bounds = array<i64: 1>}, {transform_indices = @transform_3, window_bounds = array<i64: 16, 128>}]} {
    %c0 = arith.constant 0 : index
    %c0_0 = arith.constant 0 : index
    %0 = vector.load %arg1[%c0, %c0_0] : memref<16x128xf32, #tpu.memory_space<vmem>>, vector<16x128xf32>
    %cst = arith.constant dense<0.000000e+00> : vector<16xf32>
    %1 = vector.multi_reduction <add>, %0, %cst [1] : vector<16x128xf32> to vector<16xf32>
    %2 = vector.shape_cast %1 : vector<16xf32> to vector<16x1xf32>
    %3 = arith.mulf %0, %0 : vector<16x128xf32>
    %cst_1 = arith.constant dense<0.000000e+00> : vector<16xf32>
    %4 = vector.multi_reduction <add>, %3, %cst_1 [1] : vector<16x128xf32> to vector<16xf32>
    %5 = vector.shape_cast %4 : vector<16xf32> to vector<16x1xf32>
    %cst_2 = arith.constant 7.812500e-03 : f32
    %6 = vector.broadcast %cst_2 : f32 to vector<16x1xf32>
    %7 = arith.mulf %2, %6 : vector<16x1xf32>
    %8 = arith.mulf %7, %2 : vector<16x1xf32>
    %9 = arith.subf %5, %8 : vector<16x1xf32>
    %cst_3 = arith.constant 0.00787401571 : f32
    %10 = vector.broadcast %cst_3 : f32 to vector<16x1xf32>
    %11 = arith.mulf %9, %10 : vector<16x1xf32>
    %cst_4 = arith.constant 0.000000e+00 : f32
    %12 = vector.broadcast %cst_4 : f32 to vector<16x1xf32>
    %13 = arith.maximumf %11, %12 : vector<16x1xf32>
    %14 = math.sqrt %13 : vector<16x1xf32>
    %c0_5 = arith.constant 0 : index
    %15 = memref.load %arg2[%c0_5] : memref<1xf32, #tpu.memory_space<smem>>
    %cst_6 = arith.constant 9.99999997E-7 : f32
    %16 = vector.broadcast %cst_6 : f32 to vector<16x1xf32>
    %17 = arith.addf %14, %16 : vector<16x1xf32>
    %cst_7 = arith.constant 1.000000e+00 : f32
    %18 = vector.broadcast %cst_7 : f32 to vector<16x1xf32>
    %19 = arith.divf %18, %17 : vector<16x1xf32>
    %20 = vector.broadcast %15 : f32 to vector<16x1xf32>
    %21 = arith.mulf %20, %19 : vector<16x1xf32>
    %22 = vector.broadcast %7 : vector<16x1xf32> to vector<16x128xf32>
    %23 = arith.subf %0, %22 : vector<16x128xf32>
    %24 = vector.broadcast %21 : vector<16x1xf32> to vector<16x128xf32>
    %25 = arith.mulf %23, %24 : vector<16x128xf32>
    %c0_8 = arith.constant 0 : index
    %26 = memref.load %arg3[%c0_8] : memref<1xf32, #tpu.memory_space<smem>>
    %27 = vector.broadcast %26 : f32 to vector<16x128xf32>
    %28 = arith.addf %25, %27 : vector<16x128xf32>
    %c0_9 = arith.constant 0 : index
    %c0_10 = arith.constant 0 : index
    %29 = vector.load %arg4[%c0_9, %c0_10] : memref<16x128xf32, #tpu.memory_space<vmem>>, vector<16x128xf32>
    tpu.vector_store %arg4[%c0_9, %c0_10], %28 {strides = array<i32>} : memref<16x128xf32, #tpu.memory_space<vmem>>, vector<16x128xf32>,
    return
  }
  func.func @transform_0(%arg0: i32) -> (i32, i32) {
    %c0_i32 = arith.constant 0 : i32
    %c0_i32_0 = arith.constant 0 : i32
    return %arg0, %c0_i32 : i32, i32
  }
  func.func @transform_1(%arg0: i32) -> i32 {
    %c0_i32 = arith.constant 0 : i32
    %c0_i32_0 = arith.constant 0 : i32
    return %c0_i32 : i32
  }
  func.func @transform_2(%arg0: i32) -> i32 {
    %c0_i32 = arith.constant 0 : i32
    %c0_i32_0 = arith.constant 0 : i32
    return %c0_i32 : i32
  }
  func.func @transform_3(%arg0: i32) -> (i32, i32) {
    %c0_i32 = arith.constant 0 : i32
    %c0_i32_0 = arith.constant 0 : i32
    return %arg0, %c0_i32 : i32, i32
  }
}

</mosaic_0001>

<llo_original>
// kernel: tpu_custom_call.1
$region0: #{tpu_custom_call.1}
  #allocation0 [shape = 'u32[]', space=smem, size = 0x4, offset = 0x4, fixed_abs, tag = 'smem constant byte address 0x4 - core index']
  #allocation1 [shape = 'u32[72,128]{1,0:T(1,128)}', space=vmem, size = 0x9000, scoped, tag = 'internal scratch']
  #allocation2 [shape = 'f32[1]{0:T(128)S(6)}', space=smem, size = 0x200, scoped, tag = 'scoped memory for tpu_custom_call.1']
  #allocation3 [shape = 'f32[1]{0:T(128)S(6)}', space=smem, size = 0x200, scoped, tag = 'scoped memory for tpu_custom_call.1']
  %s0 = inlined_call_operand.hbm [shape: f32[16,128], index: 0, kind: input, shape index: {}]
  %s1 = inlined_call_operand.<no memory space> [shape: f32[1], index: 1, kind: input, shape index: {}]
  %s2 = inlined_call_operand.<no memory space> [shape: f32[1], index: 2, kind: input, shape index: {}]
  %s3 = inlined_call_operand.hbm [shape: f32[16,128], index: 3, kind: output, shape index: {}]
  %s4 = sld [smem:[#allocation0]]
  $region26: #{tpu_custom_call.1} parent=0
    _
  %s6 = ssub.s32 1, %s4
  %s7 = scalar_select 0, %s6, %s4
  %8 = sst [smem:[#allocation2]] %s1
  %9 = sst [smem:[#allocation3]] %s2
  $region1: #{tpu_custom_call.1} parent=0
    #allocation4 [shape = 'u8[8192]{0}', space=vmem, size = 0x2000, scoped, tag = 'input window, operand 0, single buffered']
    #allocation5 [shape = 's32[1]{0}', space=sflag, size = 0x4, scoped, tag = 'scoped memory for tpu_custom_call.1']
    #allocation6 [shape = 's32[1]{0}', space=sflag, size = 0x4, scoped, tag = 'scoped memory for tpu_custom_call.1']
    #allocation7 [shape = 'u8[8192]{0}', space=vmem, size = 0x2000, scoped, tag = 'output window, operand 0, single buffered']
    %10 = vsyncpa [#allocation5], 0
    %11 = vsyncpa [#allocation6], 0
    // Predicated region
    $region2: #{tpu_custom_call.1} parent=1 // pred_check
      _
    $region3: #{tpu_custom_call.1} parent=1 // pred_check_branch
      %13 = sbr.rel (0) target = $region5
    $region4: #{tpu_custom_call.1} parent=1 // pred_region
      %15 = vsyncadd [#allocation5], 0
      %s16 = sshll.u32 %s0, 4
      %s17 = int_to_ptr.hbm [resolvable:$true] %s16
      %s18 = sshll.u32 [#allocation4], 4
      %s19 = int_to_ptr.vmem [resolvable:$true] %s18
      %24 = dma.hbm_to_vmem [thread:$0]  %s17, 256, %s19, [#allocation5], 128, 128, 8
    $region5: #{tpu_custom_call.1} parent=1 // pred_fallthru
      _
    // Predicated region
    $region6: #{tpu_custom_call.1} parent=1 // pred_check
      _
    $region7: #{tpu_custom_call.1} parent=1 // pred_check_branch
      %26 = sbr.rel (0) target = $region9
    $region8: #{tpu_custom_call.1} parent=1 // pred_region
      _
    $region9: #{tpu_custom_call.1} parent=1 // pred_fallthru
      _
    // Predicated region
    $region10: #{tpu_custom_call.1} parent=1 // pred_check
      _
    $region11: #{tpu_custom_call.1} parent=1 // pred_check_branch
      %28 = sbr.rel (0) target = $region13
    $region12: #{tpu_custom_call.1} parent=1 // pred_region
      _
    $region13: #{tpu_custom_call.1} parent=1 // pred_fallthru
      _
    // Predicated region
    $region14: #{tpu_custom_call.1} parent=1 // pred_check
      _
    $region15: #{tpu_custom_call.1} parent=1 // pred_check_branch
      %30 = sbr.rel (0) target = $region17
    $region16: #{tpu_custom_call.1} parent=1 // pred_region
      %32 = dma.done [#allocation5], 256
    $region17: #{tpu_custom_call.1} parent=1 // pred_fallthru
      _
    %v33 = vld [vmem:[#allocation4] sm:$0xff]
    %v34 = vld [vmem:[#allocation4 + $0x8] sm:$0xff]
    %35 = vadd.xlane.f32.xlu0 %v33
    %v36 = vpop.xlane.xlu0 %35
    %37 = vadd.xlane.f32.xlu0 %v34
    %v38 = vpop.xlane.xlu0 %37
    %v39 = vmul.f32 %v33, %v33
    %v40 = vmul.f32 %v34, %v34
    %41 = vadd.xlane.f32.xlu0 %v39
    %v42 = vpop.xlane.xlu0 %41
    %43 = vadd.xlane.f32.xlu0 %v40
    %v44 = vpop.xlane.xlu0 %43
    %v45 = vmul.f32 %v36, 0.0078125
    %v46 = vmul.f32 %v38, 0.0078125
    %v47 = vmul.f32 %v45, %v36
    %v48 = vmul.f32 %v46, %v38
    %v49 = vsub.f32 %v42, %v47
    %v50 = vsub.f32 %v44, %v48
    %v51 = vmul.f32 %v49, 0.007874016
    %v52 = vmul.f32 %v50, 0.007874016
    %v53 = vmax.f32 %v51, 0.0
    %v54 = vmax.f32 %v52, 0.0
    %v55 = vrsqrt.pop %v53
    %v56 = vmul.f32 %v55, %v53
    %v57 = vmul.f32 %v56, %v55
    %v58 = vmul.f32 0.5, %v57
    %v59 = vsub.f32 1.5, %v58
    %v60 = vmul.f32 %v55, %v59
    %v61 = vmul.f32 %v53, %v60
    %vm62 = vcmp.eq.f32.partialorder %v53, inf
    %v63 = vsel %vm62, %v53, %v61
    %vm64 = vcmp.eq.f32.partialorder %v53, 0.0
    %v65 = vand.u32 %v53, 2147483648
    %v66 = vsel %vm64, %v65, %v63
    %v67 = vrsqrt.pop %v54
    %v68 = vmul.f32 %v67, %v54
    %v69 = vmul.f32 %v68, %v67
    %v70 = vmul.f32 0.5, %v69
    %v71 = vsub.f32 1.5, %v70
    %v72 = vmul.f32 %v67, %v71
    %v73 = vmul.f32 %v54, %v72
    %vm74 = vcmp.eq.f32.partialorder %v54, inf
    %v75 = vsel %vm74, %v54, %v73
    %vm76 = vcmp.eq.f32.partialorder %v54, 0.0
    %v77 = vand.u32 %v54, 2147483648
    %v78 = vsel %vm76, %v77, %v75
    %s79 = sld [smem:[#allocation2]]
    %v80 = vadd.f32 %v66, 1e-06
    %v81 = vadd.f32 %v78, 1e-06
    %v82 = vrcp.pop %v80
    %v83 = vmul.f32 %v80, %v82
    %v84 = vsub.f32 1.0, %v83
    %v85 = vmul.f32 %v82, %v84
    %v86 = vadd.f32 %v82, %v85
    %vm87 = vweird.f32 %v80
    %vm88 = vweird.f32 %v82
    %vm89 = vmor %vm87, %vm88
    %v90 = vsel %vm89, %v82, %v86
    %v91 = vand.u32 2147483647, %v80
    %vm92 = vcmp.eq.f32.partialorder %v91, 8.507059e+37
    %v93 = vand.u32 %v80, 2147483648
    %v94 = vor.u32 1.1754944e-38, %v93
    %v95 = vsel %vm92, %v94, %v90
    %v96 = vmul.f32 1.0, %v95
    %v97 = vrcp.pop %v81
    %v98 = vmul.f32 %v81, %v97
    %v99 = vsub.f32 1.0, %v98
    %v100 = vmul.f32 %v97, %v99
    %v101 = vadd.f32 %v97, %v100
    %vm102 = vweird.f32 %v81
    %vm103 = vweird.f32 %v97
    %vm104 = vmor %vm102, %vm103
    %v105 = vsel %vm104, %v97, %v101
    %v106 = vand.u32 2147483647, %v81
    %vm107 = vcmp.eq.f32.partialorder %v106, 8.507059e+37
    %v108 = vand.u32 %v81, 2147483648
    %v109 = vor.u32 1.1754944e-38, %v108
    %v110 = vsel %vm107, %v109, %v105
    %v111 = vmul.f32 1.0, %v110
    %v112 = vstv %s79
    %v113 = vmul.f32 %v112, %v96
    %v114 = vmul.f32 %v112, %v111
    %v115 = vsub.f32 %v33, %v45
    %v116 = vsub.f32 %v34, %v46
    %v117 = vmul.f32 %v115, %v113
    %v118 = vmul.f32 %v116, %v114
    %s119 = sld [smem:[#allocation3]]
    %v120 = vstv %s119
    %v121 = vadd.f32 %v117, %v120
    %v122 = vadd.f32 %v118, %v120
    %123 = vst [vmem:[#allocation7] sm:$0xff] %v121
    %124 = vst [vmem:[#allocation7 + $0x8] sm:$0xff] %v122
    // Predicated region
    $region18: #{tpu_custom_call.1} parent=1 // pred_check
      _
    $region19: #{tpu_custom_call.1} parent=1 // pred_check_branch
      %126 = sbr.rel (0) target = $region21
    $region20: #{tpu_custom_call.1} parent=1 // pred_region
      %128 = vsyncadd [#allocation6], 0
      %s129 = sshll.u32 [#allocation7], 4
      %s130 = int_to_ptr.vmem [resolvable:$true] %s129
      %s131 = sshll.u32 %s3, 4
      %s132 = int_to_ptr.hbm [resolvable:$true] %s131
      %137 = dma.vmem_to_hbm [thread:$0]  %s130, 256, %s132, [#allocation6], 128, 128, 8
    $region21: #{tpu_custom_call.1} parent=1 // pred_fallthru
      _
    // Predicated region
    $region22: #{tpu_custom_call.1} parent=1 // pred_check
      _
    $region23: #{tpu_custom_call.1} parent=1 // pred_check_branch
      %139 = sbr.rel (0) target = $region25
    $region24: #{tpu_custom_call.1} parent=1 // pred_region
      %141 = dma.done [#allocation6], 256
    $region25: #{tpu_custom_call.1} parent=1 // pred_fallthru
      _
    %142 = vsyncpa [#allocation5], 1
    %143 = vsyncpa [#allocation6], 1

</llo_original>
